<compile_context>
chip_gen: v6e
topology: v6e:2x2x1
jax: 0.10.0
libtpu: 0.0.40
codegen_flags: <defaults>
</compile_context>

<pallas_src>
import jax
import jax.numpy as jnp
import numpy as np
from jax.experimental import pallas as pl
from jax.experimental.pallas import tpu as pltpu


def _gemm_bias_relu_kernel(p_ref, w_ref, b_ref, o_ref):
    # p_ref: (TM, K) bf16    w_ref: (K, Cout) bf16
    # b_ref: (1, Cout) f32   o_ref: (TM, Cout) f32
    acc = jnp.dot(p_ref[...], w_ref[...], preferred_element_type=jnp.float32)
    o_ref[...] = jnp.maximum(acc + b_ref[...], 0.0).astype(o_ref.dtype)


def _tensorcores_per_device() -> int:
    """2 only for chips whose TensorCores share one JAX device (v4/v5p megacore, v7x)."""
    try:
        kind = jax.devices()[0].device_kind.lower()
    except Exception:
        return 1
    return 2 if any(tag in kind for tag in ("v4", "v5p", "v7", "7x")) else 1


def _pick_tm(m_total: int, k_depth: int, cout: int, num_cores: int) -> int:
    """Largest M block that gives one block per TensorCore and stays well inside VMEM."""
    tm = m_total
    if num_cores > 1 and m_total % (8 * num_cores) == 0:
        tm = m_total // num_cores                      # one block per TC (v7x/megacore)
    # VMEM guard (only matters when batch/spatial scale up): double-buffered
    # patch + output blocks plus double-buffered weight/bias must fit with headroom.
    budget = 24 * 1024 * 1024
    fixed = 2 * (k_depth * cout * 2) + 2 * (cout * 4)
    while tm > 8 and fixed + 2 * tm * (k_depth * 2 + cout * 4) > budget:
        tm = max(8, ((tm // 2) // 8) * 8)              # keep 8-sublane alignment
    return tm


def conv_layer_forward_nhwc(x_nhwc, w_hwio, bias):
    """F.relu(Conv2d(stride=1, padding='VALID')(x)) with NHWC input / HWIO weight.

    bf16 multiplies on the MXU with f32 accumulation, fused f32 bias + ReLU.
    Returns NHWC f32 output (module semantics).
    """
    n, h, w, cin = x_nhwc.shape
    kh, kw, cin_w, cout = w_hwio.shape
    assert cin == cin_w
    oh, ow = h - kh + 1, w - kw + 1
    k = kh * kw * cin
    m_total = n * oh * ow

    # --- patch extraction: a single fused XLA op (layout only, zero math) ----
    # conv_general_dilated_patches orders the output feature dim as (cin, kh, kw)
    # ("c" major, filter spatial minor); the weight is re-laid-out to match.
    patches = jax.lax.conv_general_dilated_patches(
        x_nhwc.astype(jnp.bfloat16), filter_shape=(kh, kw),
        window_strides=(1, 1), padding="VALID",
        dimension_numbers=("NHWC", "HWIO", "NHWC"))        # (N, OH, OW, Cin*KH*KW)
    patches = patches.reshape(m_total, k)                   # (M, K) — K=324, no HBM pad;
                                                             # Mosaic pads lanes in-vreg.

    w2d = jnp.transpose(w_hwio, (2, 0, 1, 3)).reshape(k, cout).astype(jnp.bfloat16)
    b2d = bias.reshape(1, cout).astype(jnp.float32)

    # --- tiling: whole-M block on 1-TC chips, one block per TC on 2-TC chips ---
    tm = _pick_tm(m_total, k, cout, _tensorcores_per_device())
    grid_m = pl.cdiv(m_total, tm)

    cost = pl.CostEstimate(
        flops=2 * m_total * k * cout,
        transcendentals=0,
        bytes_accessed=(m_total * k * 2 + k * cout * 2 + cout * 4
                        + m_total * cout * 4))

    out2d = pl.pallas_call(
        _gemm_bias_relu_kernel,
        out_shape=jax.ShapeDtypeStruct((m_total, cout), jnp.float32),
        grid=(grid_m,),
        in_specs=[
            pl.BlockSpec((tm, k), lambda i: (i, 0)),
            pl.BlockSpec((k, cout), lambda i: (0, 0)),
            pl.BlockSpec((1, cout), lambda i: (0, 0)),
        ],
        out_specs=pl.BlockSpec((tm, cout), lambda i: (i, 0)),
        compiler_params=pltpu.CompilerParams(
            dimension_semantics=("parallel",)),
        cost_estimate=cost,
    )(patches, w2d, b2d)

    return out2d.reshape(n, oh, ow, cout)                    # NHWC


if __name__ == "__main__":
    # Small shapes consistent with ConvLayer(in_channels, out_channels, kernel_size=9)
    batch, in_channels, out_channels, ksize, spatial = 2, 4, 128, 9, 16

    key = jax.random.PRNGKey(0)
    kx, kw_key, kb = jax.random.split(key, 3)

    # Inputs built directly in NHWC / HWIO (no NCHW<->NHWC transposes in the hot path).
    x = jax.random.normal(kx, (batch, spatial, spatial, in_channels), jnp.float32)
    weight = 0.05 * jax.random.normal(
        kw_key, (ksize, ksize, in_channels, out_channels), jnp.float32)
    bias = 0.1 * jax.random.normal(kb, (out_channels,), jnp.float32)

    fwd = jax.jit(conv_layer_forward_nhwc)
    out = jax.block_until_ready(fwd(x, weight, bias))

    # Reference: same bf16-rounded operands, f32 conv + bias + ReLU — matches the
    # kernel's bf16-multiply / f32-accumulate path up to accumulation order.
    # TODO(synk): strict f32-multiply parity with the PyTorch module would need f32
    # MXU operands (~2-3x matmul cost; irrelevant here since the layer is DMA-bound).
    x_r = x.astype(jnp.bfloat16).astype(jnp.float32)
    w_r = weight.astype(jnp.bfloat16).astype(jnp.float32)
    ref = jax.lax.conv_general_dilated(
        x_r, w_r, window_strides=(1, 1), padding="VALID",
        dimension_numbers=("NHWC", "HWIO", "NHWC"))
    ref = jnp.maximum(ref + bias[None, None, None, :], 0.0)

    assert out.shape == (batch, spatial - ksize + 1,
                         spatial - ksize + 1, out_channels)
    np.testing.assert_allclose(np.asarray(out), np.asarray(ref),
                               rtol=2e-3, atol=2e-3)
    print("KERNEL_OK")
</pallas_src>

<mosaic_0001>
module attributes {stable_mosaic.version = 11 : i64} {
  func.func @_gemm_bias_relu_kernel(%arg0: i32, %arg1: memref<128x324xbf16, #tpu.memory_space<vmem>>, %arg2: memref<324x128xbf16, #tpu.memory_space<vmem>>, %arg3: memref<1x128xf32, #tpu.memory_space<vmem>>, %arg4: memref<128x128xf32, #tpu.memory_space<vmem>>) attributes {dimension_semantics = [#tpu.dimension_semantics<parallel>], iteration_bounds = array<i64: 1>, scalar_prefetch = 0 : i64, scratch_operands = 0 : i64, tpu.core_type = #tpu.core_type<tc>, window_params = [{transform_indices = @transform_0, window_bounds = array<i64: 128, 324>}, {pipeline_mode = #tpu.pipeline_mode<synchronous>, transform_indices = @transform_1, window_bounds = array<i64: 324, 128>}, {pipeline_mode = #tpu.pipeline_mode<synchronous>, transform_indices = @transform_2, window_bounds = array<i64: 1, 128>}, {transform_indices = @transform_3, window_bounds = array<i64: 128, 128>}]} {
    %c0 = arith.constant 0 : index
    %c0_0 = arith.constant 0 : index
    %0 = vector.load %arg1[%c0, %c0_0] : memref<128x324xbf16, #tpu.memory_space<vmem>>, vector<128x324xbf16>
    %c0_1 = arith.constant 0 : index
    %c0_2 = arith.constant 0 : index
    %1 = vector.load %arg2[%c0_1, %c0_2] : memref<324x128xbf16, #tpu.memory_space<vmem>>, vector<324x128xbf16>
    %cst = arith.constant dense<0.000000e+00> : vector<128x128xf32>
    %2 = tpu.matmul %0, %1, %cst {dimension_numbers = #tpu.dot_dimension_numbers<[1], [0], [0], [1], [0, 0, 1, 1], [], []>} : vector<128x324xbf16>, vector<324x128xbf16>, vector<128x128xf32> -> vector<128x128xf32>
    %c0_3 = arith.constant 0 : index
    %c0_4 = arith.constant 0 : index
    %3 = vector.load %arg3[%c0_3, %c0_4] : memref<1x128xf32, #tpu.memory_space<vmem>>, vector<1x128xf32>
    %4 = vector.broadcast %3 : vector<1x128xf32> to vector<128x128xf32>
    %5 = arith.addf %2, %4 : vector<128x128xf32>
    %cst_5 = arith.constant 0.000000e+00 : f32
    %6 = vector.broadcast %cst_5 : f32 to vector<128x128xf32>
    %7 = arith.maximumf %5, %6 : vector<128x128xf32>
    %c0_6 = arith.constant 0 : index
    %c0_7 = arith.constant 0 : index
    %8 = vector.load %arg4[%c0_6, %c0_7] : memref<128x128xf32, #tpu.memory_space<vmem>>, vector<128x128xf32>
    tpu.vector_store %arg4[%c0_6, %c0_7], %7 {strides = array<i32>} : memref<128x128xf32, #tpu.memory_space<vmem>>, vector<128x128xf32>,
    return
  }
  func.func @transform_0(%arg0: i32) -> (i32, i32) {
    %c0_i32 = arith.constant 0 : i32
    %c0_i32_0 = arith.constant 0 : i32
    return %arg0, %c0_i32 : i32, i32
  }
  func.func @transform_1(%arg0: i32) -> (i32, i32) {
    %c0_i32 = arith.constant 0 : i32
    %c0_i32_0 = arith.constant 0 : i32
    %c0_i32_1 = arith.constant 0 : i32
    return %c0_i32, %c0_i32_0 : i32, i32
  }
  func.func @transform_2(%arg0: i32) -> (i32, i32) {
    %c0_i32 = arith.constant 0 : i32
    %c0_i32_0 = arith.constant 0 : i32
    %c0_i32_1 = arith.constant 0 : i32
    return %c0_i32, %c0_i32_0 : i32, i32
  }
  func.func @transform_3(%arg0: i32) -> (i32, i32) {
    %c0_i32 = arith.constant 0 : i32
    %c0_i32_0 = arith.constant 0 : i32
    return %arg0, %c0_i32 : i32, i32
  }
}

</mosaic_0001>

<llo_original>
// kernel: conv_layer_forward_nhwc.1
$region0: #{conv_layer_forward_nhwc.1}
  #allocation0 [shape = 'u32[]', space=smem, size = 0x4, offset = 0x4, fixed_abs, tag = 'smem constant byte address 0x4 - core index']
  #allocation1 [shape = 'u32[144,128]{1,0:T(1,128)}', space=vmem, size = 0x12000, scoped, tag = 'internal scratch']
  %s0 = inlined_call_operand.vmem [shape: bf16[128,324], index: 0, kind: input, shape index: {}]
  %s1 = inlined_call_operand.vmem [shape: bf16[324,128], index: 1, kind: input, shape index: {}]
  %s2 = inlined_call_operand.vmem [shape: f32[1,128], index: 2, kind: input, shape index: {}]
  %s3 = inlined_call_operand.hbm [shape: f32[128,128], index: 3, kind: output, shape index: {}]
  %s4 = sld [smem:[#allocation0]]
  $region22: #{conv_layer_forward_nhwc.1} parent=0
    _
  %s6 = ssub.s32 1, %s4
  %s7 = scalar_select 0, %s6, %s4
  $region1: #{conv_layer_forward_nhwc.1} parent=0
    #allocation2 [shape = 'u8[65536]{0}', space=vmem, size = 0x10000, scoped, tag = 'output window, operand 0, single buffered']
    #allocation3 [shape = 's32[1]{0}', space=sflag, size = 0x4, scoped, tag = 'scoped memory for conv_layer_forward_nhwc.1']
    %8 = vsyncpa [#allocation3], 0
    // Predicated region
    $region2: #{conv_layer_forward_nhwc.1} parent=1 // pred_check
      _
    $region3: #{conv_layer_forward_nhwc.1} parent=1 // pred_check_branch
      %10 = sbr.rel (0) target = $region5
    $region4: #{conv_layer_forward_nhwc.1} parent=1 // pred_region
      _
    $region5: #{conv_layer_forward_nhwc.1} parent=1 // pred_fallthru
      _
    // Predicated region
    $region6: #{conv_layer_forward_nhwc.1} parent=1 // pred_check
      _
    $region7: #{conv_layer_forward_nhwc.1} parent=1 // pred_check_branch
      %12 = sbr.rel (0) target = $region9
    $region8: #{conv_layer_forward_nhwc.1} parent=1 // pred_region
      _
    $region9: #{conv_layer_forward_nhwc.1} parent=1 // pred_fallthru
      _
    // Predicated region
    $region10: #{conv_layer_forward_nhwc.1} parent=1 // pred_check
      _
    $region11: #{conv_layer_forward_nhwc.1} parent=1 // pred_check_branch
      %14 = sbr.rel (0) target = $region13
    $region12: #{conv_layer_forward_nhwc.1} parent=1 // pred_region
      _
    $region13: #{conv_layer_forward_nhwc.1} parent=1 // pred_fallthru
      _
    %v16 = vld [vmem:[%s0] sm:$0xff]
    %v17 = vld [vmem:[%s0 + $0x8] sm:$0xf]
    %v18 = vld [vmem:[%s0 + $0xc] sm:$0xff]
    %v19 = vld [vmem:[%s0 + $0x14] sm:$0xf]
    %v20 = vld [vmem:[%s0 + $0x18] sm:$0xff]
    %v21 = vld [vmem:[%s0 + $0x20] sm:$0xf]
    %v22 = vld [vmem:[%s0 + $0x24] sm:$0xff]
    %v23 = vld [vmem:[%s0 + $0x2c] sm:$0xf]
    %v24 = vld [vmem:[%s0 + $0x30] sm:$0xff]
    %v25 = vld [vmem:[%s0 + $0x38] sm:$0xf]
    %v26 = vld [vmem:[%s0 + $0x3c] sm:$0xff]
    %v27 = vld [vmem:[%s0 + $0x44] sm:$0xf]
    %v28 = vld [vmem:[%s0 + $0x48] sm:$0xff]
    %v29 = vld [vmem:[%s0 + $0x50] sm:$0xf]
    %v30 = vld [vmem:[%s0 + $0x54] sm:$0xff]
    %v31 = vld [vmem:[%s0 + $0x5c] sm:$0xf]
    %v32 = vld [vmem:[%s0 + $0x60] sm:$0xff]
    %v33 = vld [vmem:[%s0 + $0x68] sm:$0xf]
    %v34 = vld [vmem:[%s0 + $0x6c] sm:$0xff]
    %v35 = vld [vmem:[%s0 + $0x74] sm:$0xf]
    %v36 = vld [vmem:[%s0 + $0x78] sm:$0xff]
    %v37 = vld [vmem:[%s0 + $0x80] sm:$0xf]
    %v38 = vld [vmem:[%s0 + $0x84] sm:$0xff]
    %v39 = vld [vmem:[%s0 + $0x8c] sm:$0xf]
    %v40 = vld [vmem:[%s0 + $0x90] sm:$0xff]
    %v41 = vld [vmem:[%s0 + $0x98] sm:$0xf]
    %v42 = vld [vmem:[%s0 + $0x9c] sm:$0xff]
    %v43 = vld [vmem:[%s0 + $0xa4] sm:$0xf]
    %v44 = vld [vmem:[%s0 + $0xa8] sm:$0xff]
    %v45 = vld [vmem:[%s0 + $0xb0] sm:$0xf]
    %v46 = vld [vmem:[%s0 + $0xb4] sm:$0xff]
    %v47 = vld [vmem:[%s0 + $0xbc] sm:$0xf]
    %v48 = vld [vmem:[%s1] sm:$0xf]
    %v49 = vld [vmem:[%s1 + $0x4] sm:$0xf]
    %v50 = vld [vmem:[%s1 + $0x8] sm:$0xf]
    %v51 = vld [vmem:[%s1 + $0xc] sm:$0xf]
    %v52 = vld [vmem:[%s1 + $0x10] sm:$0xf]
    %v53 = vld [vmem:[%s1 + $0x14] sm:$0xf]
    %v54 = vld [vmem:[%s1 + $0x18] sm:$0xf]
    %v55 = vld [vmem:[%s1 + $0x1c] sm:$0xf]
    %v56 = vld [vmem:[%s1 + $0x20] sm:$0xf]
    %v57 = vld [vmem:[%s1 + $0x24] sm:$0xf]
    %v58 = vld [vmem:[%s1 + $0x28] sm:$0xf]
    %v59 = vld [vmem:[%s1 + $0x2c] sm:$0xf]
    %v60 = vld [vmem:[%s1 + $0x30] sm:$0xf]
    %v61 = vld [vmem:[%s1 + $0x34] sm:$0xf]
    %v62 = vld [vmem:[%s1 + $0x38] sm:$0xf]
    %v63 = vld [vmem:[%s1 + $0x3c] sm:$0xf]
    %v64 = vld [vmem:[%s1 + $0x40] sm:$0xf]
    %v65 = vld [vmem:[%s1 + $0x44] sm:$0xf]
    %v66 = vld [vmem:[%s1 + $0x48] sm:$0xf]
    %v67 = vld [vmem:[%s1 + $0x4c] sm:$0xf]
    %v68 = vld [vmem:[%s1 + $0x50] sm:$0xf]
    %v69 = vld [vmem:[%s1 + $0x54] sm:$0xf]
    %v70 = vld [vmem:[%s1 + $0x58] sm:$0xf]
    %v71 = vld [vmem:[%s1 + $0x5c] sm:$0xf]
    %v72 = vld [vmem:[%s1 + $0x60] sm:$0xf]
    %v73 = vld [vmem:[%s1 + $0x64] sm:$0xf]
    %v74 = vld [vmem:[%s1 + $0x68] sm:$0xf]
    %v75 = vld [vmem:[%s1 + $0x6c] sm:$0xf]
    %v76 = vld [vmem:[%s1 + $0x70] sm:$0xf]
    %v77 = vld [vmem:[%s1 + $0x74] sm:$0xf]
    %v78 = vld [vmem:[%s1 + $0x78] sm:$0xf]
    %v79 = vld [vmem:[%s1 + $0x7c] sm:$0xf]
    %v80 = vld [vmem:[%s1 + $0x80] sm:$0xf]
    %v81 = vld [vmem:[%s1 + $0x84] sm:$0xf]
    %v82 = vld [vmem:[%s1 + $0x88] sm:$0xf]
    %v83 = vld [vmem:[%s1 + $0x8c] sm:$0xf]
    %v84 = vld [vmem:[%s1 + $0x90] sm:$0xf]
    %v85 = vld [vmem:[%s1 + $0x94] sm:$0xf]
    %v86 = vld [vmem:[%s1 + $0x98] sm:$0xf]
    %v87 = vld [vmem:[%s1 + $0x9c] sm:$0xf]
    %v88 = vld [vmem:[%s1 + $0xa0] sm:$0x3]
    %v89 = vld [vmem:[%s2] sm:$0x1]
    %v91 = vlaneseq
    %v92 = vshrl.u32 %v91, 7
    %v93 = vsub.s32 0, %v92
    %v94 = vrot.slane %v89, %v93
    %v128 = vunpack.c.l.b16 %v16
    %v129 = vunpack.c.h.b16 %v16
    %v130 = vunpack.c.l.b16 %v17
    %v131 = vunpack.c.l.b16 %v18
    %v132 = vunpack.c.h.b16 %v18
    %v133 = vunpack.c.l.b16 %v19
    %v134 = vunpack.c.l.b16 %v20
    %v135 = vunpack.c.h.b16 %v20
    %v136 = vunpack.c.l.b16 %v21
    %v137 = vunpack.c.l.b16 %v22
    %v138 = vunpack.c.h.b16 %v22
    %v139 = vunpack.c.l.b16 %v23
    %v140 = vunpack.c.l.b16 %v24
    %v141 = vunpack.c.h.b16 %v24
    %v142 = vunpack.c.l.b16 %v25
    %v143 = vunpack.c.l.b16 %v26
    %v144 = vunpack.c.h.b16 %v26
    %v145 = vunpack.c.l.b16 %v27
    %v146 = vunpack.c.l.b16 %v28
    %v147 = vunpack.c.h.b16 %v28
    %v148 = vunpack.c.l.b16 %v29
    %v149 = vunpack.c.l.b16 %v30
    %v150 = vunpack.c.h.b16 %v30
    %v151 = vunpack.c.l.b16 %v31
    %v152 = vunpack.c.l.b16 %v32
    %v153 = vunpack.c.h.b16 %v32
    %v154 = vunpack.c.l.b16 %v33
    %v155 = vunpack.c.l.b16 %v34
    %v156 = vunpack.c.h.b16 %v34
    %v157 = vunpack.c.l.b16 %v35
    %v158 = vunpack.c.l.b16 %v36
    %v159 = vunpack.c.h.b16 %v36
    %v160 = vunpack.c.l.b16 %v37
    %v161 = vunpack.c.l.b16 %v38
    %v162 = vunpack.c.h.b16 %v38
    %v163 = vunpack.c.l.b16 %v39
    %v164 = vunpack.c.l.b16 %v40
    %v165 = vunpack.c.h.b16 %v40
    %v166 = vunpack.c.l.b16 %v41
    %v167 = vunpack.c.l.b16 %v42
    %v168 = vunpack.c.h.b16 %v42
    %v169 = vunpack.c.l.b16 %v43
    %v170 = vunpack.c.l.b16 %v44
    %v171 = vunpack.c.h.b16 %v44
    %v172 = vunpack.c.l.b16 %v45
    %v173 = vunpack.c.l.b16 %v46
    %v174 = vunpack.c.h.b16 %v46
    %v175 = vunpack.c.l.b16 %v47
    %v176 = vpack.c.b16 %v131, %v128
    %v177 = vpack.c.b16 %v132, %v129
    %v178 = vpack.c.b16 %v133, %v130
    %v179 = vpack.c.b16 %v137, %v134
    %v180 = vpack.c.b16 %v138, %v135
    %v181 = vpack.c.b16 %v139, %v136
    %v182 = vpack.c.b16 %v143, %v140
    %v183 = vpack.c.b16 %v144, %v141
    %v184 = vpack.c.b16 %v145, %v142
    %v185 = vpack.c.b16 %v149, %v146
    %v186 = vpack.c.b16 %v150, %v147
    %v187 = vpack.c.b16 %v151, %v148
    %v188 = vpack.c.b16 %v155, %v152
    %v189 = vpack.c.b16 %v156, %v153
    %v190 = vpack.c.b16 %v157, %v154
    %v191 = vpack.c.b16 %v161, %v158
    %v192 = vpack.c.b16 %v162, %v159
    %v193 = vpack.c.b16 %v163, %v160
    %v194 = vpack.c.b16 %v167, %v164
    %v195 = vpack.c.b16 %v168, %v165
    %v196 = vpack.c.b16 %v169, %v166
    %v197 = vpack.c.b16 %v173, %v170
    %v198 = vpack.c.b16 %v174, %v171
    %v199 = vpack.c.b16 %v175, %v172
    %v257 = vunpack.c.l.b16 %v48
    %v258 = vunpack.c.l.b16 %v49
    %v259 = vunpack.c.l.b16 %v50
    %v260 = vunpack.c.l.b16 %v51
    %v261 = vunpack.c.l.b16 %v52
    %v262 = vunpack.c.l.b16 %v53
    %v263 = vunpack.c.l.b16 %v54
    %v264 = vunpack.c.l.b16 %v55
    %v265 = vunpack.c.l.b16 %v56
    %v266 = vunpack.c.l.b16 %v57
    %v267 = vunpack.c.l.b16 %v58
    %v268 = vunpack.c.l.b16 %v59
    %v269 = vunpack.c.l.b16 %v60
    %v270 = vunpack.c.l.b16 %v61
    %v271 = vunpack.c.l.b16 %v62
    %v272 = vunpack.c.l.b16 %v63
    %v273 = vunpack.c.l.b16 %v64
    %v274 = vunpack.c.l.b16 %v65
    %v275 = vunpack.c.l.b16 %v66
    %v276 = vunpack.c.l.b16 %v67
    %v277 = vunpack.c.l.b16 %v68
    %v278 = vunpack.c.l.b16 %v69
    %v279 = vunpack.c.l.b16 %v70
    %v280 = vunpack.c.l.b16 %v71
    %v281 = vunpack.c.l.b16 %v72
    %v282 = vunpack.c.l.b16 %v73
    %v283 = vunpack.c.l.b16 %v74
    %v284 = vunpack.c.l.b16 %v75
    %v285 = vunpack.c.l.b16 %v76
    %v286 = vunpack.c.l.b16 %v77
    %v287 = vunpack.c.l.b16 %v78
    %v288 = vunpack.c.l.b16 %v79
    %v289 = vunpack.c.l.b16 %v80
    %v290 = vunpack.c.l.b16 %v81
    %v291 = vunpack.c.l.b16 %v82
    %v292 = vunpack.c.l.b16 %v83
    %v293 = vunpack.c.l.b16 %v84
    %v294 = vunpack.c.l.b16 %v85
    %v295 = vunpack.c.l.b16 %v86
    %v296 = vunpack.c.l.b16 %v87
    %v297 = vunpack.c.l.b16 %v88
    %v298 = vpack.c.b16 %v258, %v257
    %v299 = vpack.c.b16 %v260, %v259
    %v300 = vpack.c.b16 %v262, %v261
    %v301 = vpack.c.b16 %v264, %v263
    %v302 = vpack.c.b16 %v266, %v265
    %v303 = vpack.c.b16 %v268, %v267
    %v304 = vpack.c.b16 %v270, %v269
    %v305 = vpack.c.b16 %v272, %v271
    %v306 = vpack.c.b16 %v274, %v273
    %v307 = vpack.c.b16 %v276, %v275
    %v308 = vpack.c.b16 %v278, %v277
    %v309 = vpack.c.b16 %v280, %v279
    %v310 = vpack.c.b16 %v282, %v281
    %v311 = vpack.c.b16 %v284, %v283
    %v312 = vpack.c.b16 %v286, %v285
    %v313 = vpack.c.b16 %v288, %v287
    %v314 = vpack.c.b16 %v290, %v289
    %v315 = vpack.c.b16 %v292, %v291
    %v316 = vpack.c.b16 %v294, %v293
    %v317 = vpack.c.b16 %v296, %v295
    %v318 = vpack.c.b16 %v297, %v297
    %vm339 = vcmask 556032
    %v341 = vsel %vm339, %v178, 0
    %v344 = vsel %vm339, %v181, 0
    %v347 = vsel %vm339, %v184, 0
    %v350 = vsel %vm339, %v187, 0
    %v353 = vsel %vm339, %v190, 0
    %v356 = vsel %vm339, %v193, 0
    %v359 = vsel %vm339, %v196, 0
    %v362 = vsel %vm339, %v199, 0
    %vm364 = vcmask 1041408
    %v366 = vsel %vm364, %v318, 0
    %368 = vmatprep.subr.bf16.mxu0 0
    %369 = vmatpush1.bf16.msra.mxu0 %v305
    %370 = vmatprep.subr.bf16.mxu0 0
    %371 = vmatpush1.bf16.msra.mxu0 %v304
    %372 = vmatprep.subr.bf16.mxu0 0
    %373 = vmatpush1.bf16.msra.mxu0 %v303
    %374 = vmatprep.subr.bf16.mxu0 0
    %375 = vmatpush1.bf16.msra.mxu0 %v302
    %376 = vmatprep.subr.bf16.mxu0 0
    %377 = vmatpush1.bf16.msra.mxu0 %v301
    %378 = vmatprep.subr.bf16.mxu0 0
    %379 = vmatpush1.bf16.msra.mxu0 %v300
    %380 = vmatprep.subr.bf16.mxu0 0
    %381 = vmatpush1.bf16.msra.mxu0 %v299
    %382 = vmatprep.subr.bf16.mxu0 0
    %383 = vmatpush1.bf16.msra.mxu0 %v298
    %384 = vmatprep.subr.bf16.mxu0 0
    %385 = vmatpush2.bf16.msra.mxu0 %v313
    %386 = vmatprep.subr.bf16.mxu0 0
    %387 = vmatpush2.bf16.msra.mxu0 %v312
    %388 = vmatprep.subr.bf16.mxu0 0
    %389 = vmatpush2.bf16.msra.mxu0 %v311
    %390 = vmatprep.subr.bf16.mxu0 0
    %391 = vmatpush2.bf16.msra.mxu0 %v310
    %392 = vmatprep.subr.bf16.mxu0 0
    %393 = vmatpush2.bf16.msra.mxu0 %v309
    %394 = vmatprep.subr.bf16.mxu0 0
    %395 = vmatpush2.bf16.msra.mxu0 %v308
    %396 = vmatprep.subr.bf16.mxu0 0
    %397 = vmatpush2.bf16.msra.mxu0 %v307
    %398 = vmatprep.subr.bf16.mxu0 0
    %399 = vmatpush2.bf16.msra.mxu0 %v306
    %400 = vmatprep.mubr.bf16.mxu0 %v177
    %401 = vmatmul.mubr.bf16.gmra.mxu0 %v176
    %v402 = vpop.f32.mrf.mxu0
    %v403 = vadd.f32 %v94, %v402
    %v404 = vpop.f32.mrf.mxu0
    %v405 = vpop.f32.mrf.mxu0
    %v406 = vadd.f32 %v94, %v405
    %v407 = vpop.f32.mrf.mxu0
    %408 = vmatprep.mubr.bf16.mxu0 %v180
    %409 = vmatmul.mubr.bf16.gmra.mxu0 %v179
    %v410 = vpop.f32.mrf.mxu0
    %v411 = vadd.f32 %v94, %v410
    %v412 = vpop.f32.mrf.mxu0
    %v413 = vpop.f32.mrf.mxu0
    %v414 = vadd.f32 %v94, %v413
    %v415 = vpop.f32.mrf.mxu0
    %416 = vmatprep.mubr.bf16.mxu0 %v183
    %417 = vmatmul.mubr.bf16.gmra.mxu0 %v182
    %v418 = vpop.f32.mrf.mxu0
    %v419 = vadd.f32 %v94, %v418
    %v420 = vpop.f32.mrf.mxu0
    %v421 = vpop.f32.mrf.mxu0
    %v422 = vadd.f32 %v94, %v421
    %v423 = vpop.f32.mrf.mxu0
    %424 = vmatprep.mubr.bf16.mxu0 %v186
    %425 = vmatmul.mubr.bf16.gmra.mxu0 %v185
    %v426 = vpop.f32.mrf.mxu0
    %v427 = vadd.f32 %v94, %v426
    %v428 = vpop.f32.mrf.mxu0
    %v429 = vpop.f32.mrf.mxu0
    %v430 = vadd.f32 %v94, %v429
    %v431 = vpop.f32.mrf.mxu0
    %432 = vmatprep.mubr.bf16.mxu0 %v189
    %433 = vmatmul.mubr.bf16.gmra.mxu0 %v188
    %v434 = vpop.f32.mrf.mxu0
    %v435 = vadd.f32 %v94, %v434
    %v436 = vpop.f32.mrf.mxu0
    %v437 = vpop.f32.mrf.mxu0
    %v438 = vadd.f32 %v94, %v437
    %v439 = vpop.f32.mrf.mxu0
    %440 = vmatprep.mubr.bf16.mxu0 %v192
    %441 = vmatmul.mubr.bf16.gmra.mxu0 %v191
    %v442 = vpop.f32.mrf.mxu0
    %v443 = vadd.f32 %v94, %v442
    %v444 = vpop.f32.mrf.mxu0
    %v445 = vpop.f32.mrf.mxu0
    %v446 = vadd.f32 %v94, %v445
    %v447 = vpop.f32.mrf.mxu0
    %448 = vmatprep.mubr.bf16.mxu0 %v195
    %449 = vmatmul.mubr.bf16.gmra.mxu0 %v194
    %v450 = vpop.f32.mrf.mxu0
    %v451 = vadd.f32 %v94, %v450
    %v452 = vpop.f32.mrf.mxu0
    %v453 = vpop.f32.mrf.mxu0
    %v454 = vadd.f32 %v94, %v453
    %v455 = vpop.f32.mrf.mxu0
    %456 = vmatprep.mubr.bf16.mxu0 %v198
    %457 = vmatmul.mubr.bf16.gmra.mxu0 %v197
    %v458 = vpop.f32.mrf.mxu0
    %v459 = vadd.f32 %v94, %v458
    %v460 = vpop.f32.mrf.mxu0
    %v461 = vpop.f32.mrf.mxu0
    %v462 = vadd.f32 %v94, %v461
    %v463 = vpop.f32.mrf.mxu0
    %464 = vdwg.mxu0
    %465 = vmatprep.subr.bf16.mxu0 0
    %466 = vmatpush1.bf16.msra.mxu0 0
    %467 = vmatprep.subr.bf16.mxu0 0
    %468 = vmatpush1.bf16.msra.mxu0 0
    %469 = vmatprep.subr.bf16.mxu0 0
    %470 = vmatpush1.bf16.msra.mxu0 0
    %471 = vmatprep.subr.bf16.mxu0 0
    %472 = vmatpush1.bf16.msra.mxu0 %v366
    %473 = vmatprep.subr.bf16.mxu0 0
    %474 = vmatpush1.bf16.msra.mxu0 %v317
    %475 = vmatprep.subr.bf16.mxu0 0
    %476 = vmatpush1.bf16.msra.mxu0 %v316
    %477 = vmatprep.subr.bf16.mxu0 0
    %478 = vmatpush1.bf16.msra.mxu0 %v315
    %479 = vmatprep.subr.bf16.mxu0 0
    %480 = vmatpush1.bf16.msra.mxu0 %v314
    %481 = vmatprep.subr.bf16.mxu0 0
    %482 = vmatpush2.bf16.msra.mxu0 0
    %483 = vmatprep.subr.bf16.mxu0 0
    %484 = vmatpush2.bf16.msra.mxu0 0
    %485 = vmatprep.subr.bf16.mxu0 0
    %486 = vmatpush2.bf16.msra.mxu0 0
    %487 = vmatprep.subr.bf16.mxu0 0
    %488 = vmatpush2.bf16.msra.mxu0 0
    %489 = vmatprep.subr.bf16.mxu0 0
    %490 = vmatpush2.bf16.msra.mxu0 0
    %491 = vmatprep.subr.bf16.mxu0 0
    %492 = vmatpush2.bf16.msra.mxu0 0
    %493 = vmatprep.subr.bf16.mxu0 0
    %494 = vmatpush2.bf16.msra.mxu0 0
    %495 = vmatprep.subr.bf16.mxu0 0
    %496 = vmatpush2.bf16.msra.mxu0 0
    %497 = vmatprep.mubr.bf16.mxu0 0
    %498 = vmatmul.mubr.bf16.gmra.mxu0 %v341
    %v499 = vpop.f32.mrf.mxu0
    %v500 = vadd.f32 %v403, %v499
    %v501 = vpop.f32.mrf.mxu0
    %v502 = vpop.f32.mrf.mxu0
    %v503 = vadd.f32 %v406, %v502
    %v504 = vpop.f32.mrf.mxu0
    %505 = vmatprep.mubr.bf16.mxu0 0
    %506 = vmatmul.mubr.bf16.gmra.mxu0 %v344
    %v507 = vpop.f32.mrf.mxu0
    %v508 = vadd.f32 %v411, %v507
    %v509 = vpop.f32.mrf.mxu0
    %v510 = vpop.f32.mrf.mxu0
    %v511 = vadd.f32 %v414, %v510
    %v512 = vpop.f32.mrf.mxu0
    %513 = vmatprep.mubr.bf16.mxu0 0
    %514 = vmatmul.mubr.bf16.gmra.mxu0 %v347
    %v515 = vpop.f32.mrf.mxu0
    %v516 = vadd.f32 %v419, %v515
    %v517 = vpop.f32.mrf.mxu0
    %v518 = vpop.f32.mrf.mxu0
    %v519 = vadd.f32 %v422, %v518
    %v520 = vpop.f32.mrf.mxu0
    %521 = vmatprep.mubr.bf16.mxu0 0
    %522 = vmatmul.mubr.bf16.gmra.mxu0 %v350
    %v523 = vpop.f32.mrf.mxu0
    %v524 = vadd.f32 %v427, %v523
    %v525 = vpop.f32.mrf.mxu0
    %v526 = vpop.f32.mrf.mxu0
    %v527 = vadd.f32 %v430, %v526
    %v528 = vpop.f32.mrf.mxu0
    %529 = vmatprep.mubr.bf16.mxu0 0
    %530 = vmatmul.mubr.bf16.gmra.mxu0 %v353
    %v531 = vpop.f32.mrf.mxu0
    %v532 = vadd.f32 %v435, %v531
    %v533 = vpop.f32.mrf.mxu0
    %v534 = vpop.f32.mrf.mxu0
    %v535 = vadd.f32 %v438, %v534
    %v536 = vpop.f32.mrf.mxu0
    %537 = vmatprep.mubr.bf16.mxu0 0
    %538 = vmatmul.mubr.bf16.gmra.mxu0 %v356
    %v539 = vpop.f32.mrf.mxu0
    %v540 = vadd.f32 %v443, %v539
    %v541 = vpop.f32.mrf.mxu0
    %v542 = vpop.f32.mrf.mxu0
    %v543 = vadd.f32 %v446, %v542
    %v544 = vpop.f32.mrf.mxu0
    %545 = vmatprep.mubr.bf16.mxu0 0
    %546 = vmatmul.mubr.bf16.gmra.mxu0 %v359
    %v547 = vpop.f32.mrf.mxu0
    %v548 = vadd.f32 %v451, %v547
    %v549 = vpop.f32.mrf.mxu0
    %v550 = vpop.f32.mrf.mxu0
    %v551 = vadd.f32 %v454, %v550
    %v552 = vpop.f32.mrf.mxu0
    %553 = vmatprep.mubr.bf16.mxu0 0
    %554 = vmatmul.mubr.bf16.gmra.mxu0 %v362
    %v555 = vpop.f32.mrf.mxu0
    %v556 = vadd.f32 %v459, %v555
    %v557 = vpop.f32.mrf.mxu0
    %v558 = vpop.f32.mrf.mxu0
    %v559 = vadd.f32 %v462, %v558
    %v560 = vpop.f32.mrf.mxu0
    %561 = vdwg.mxu0
    %v562 = vmax.f32 %v500, 0.0
    %v563 = vmax.f32 %v503, 0.0
    %v564 = vmax.f32 %v508, 0.0
    %v565 = vmax.f32 %v511, 0.0
    %v566 = vmax.f32 %v516, 0.0
    %v567 = vmax.f32 %v519, 0.0
    %v568 = vmax.f32 %v524, 0.0
    %v569 = vmax.f32 %v527, 0.0
    %v570 = vmax.f32 %v532, 0.0
    %v571 = vmax.f32 %v535, 0.0
    %v572 = vmax.f32 %v540, 0.0
    %v573 = vmax.f32 %v543, 0.0
    %v574 = vmax.f32 %v548, 0.0
    %v575 = vmax.f32 %v551, 0.0
    %v576 = vmax.f32 %v556, 0.0
    %v577 = vmax.f32 %v559, 0.0
    %578 = vst [vmem:[#allocation2] sm:$0xff] %v562
    %579 = vst [vmem:[#allocation2 + $0x8] sm:$0xff] %v563
    %580 = vst [vmem:[#allocation2 + $0x10] sm:$0xff] %v564
    %581 = vst [vmem:[#allocation2 + $0x18] sm:$0xff] %v565
    %582 = vst [vmem:[#allocation2 + $0x20] sm:$0xff] %v566
    %583 = vst [vmem:[#allocation2 + $0x28] sm:$0xff] %v567
    %584 = vst [vmem:[#allocation2 + $0x30] sm:$0xff] %v568
    %585 = vst [vmem:[#allocation2 + $0x38] sm:$0xff] %v569
    %586 = vst [vmem:[#allocation2 + $0x40] sm:$0xff] %v570
    %587 = vst [vmem:[#allocation2 + $0x48] sm:$0xff] %v571
    %588 = vst [vmem:[#allocation2 + $0x50] sm:$0xff] %v572
    %589 = vst [vmem:[#allocation2 + $0x58] sm:$0xff] %v573
    %590 = vst [vmem:[#allocation2 + $0x60] sm:$0xff] %v574
    %591 = vst [vmem:[#allocation2 + $0x68] sm:$0xff] %v575
    %592 = vst [vmem:[#allocation2 + $0x70] sm:$0xff] %v576
    %593 = vst [vmem:[#allocation2 + $0x78] sm:$0xff] %v577
    // Predicated region
    $region14: #{conv_layer_forward_nhwc.1} parent=1 // pred_check
      _
    $region15: #{conv_layer_forward_nhwc.1} parent=1 // pred_check_branch
      %595 = sbr.rel (0) target = $region17
    $region16: #{conv_layer_forward_nhwc.1} parent=1 // pred_region
      %s597 = ssub.s32 2048, 2048
      %598 = vsyncadd [#allocation3], %s597
      %s599 = sshll.u32 [#allocation2], 4
      %s600 = int_to_ptr.vmem [resolvable:$true] %s599
      %605 = dma.vmem_to_hbm [thread:$0]  %s600, 2048, %s3, [#allocation3], 128, 128, 8
    $region17: #{conv_layer_forward_nhwc.1} parent=1 // pred_fallthru
      _
    // Predicated region
    $region18: #{conv_layer_forward_nhwc.1} parent=1 // pred_check
      _
    $region19: #{conv_layer_forward_nhwc.1} parent=1 // pred_check_branch
      %607 = sbr.rel (0) target = $region21
    $region20: #{conv_layer_forward_nhwc.1} parent=1 // pred_region
      %608 = dma.done [#allocation3], 2048
    $region21: #{conv_layer_forward_nhwc.1} parent=1 // pred_fallthru
      _
    %609 = vsyncpa [#allocation3], 1

</llo_original>
